<compile_context>
chip_gen: v7x
topology: tpu7x:2x2x1
jax: 0.10.0
libtpu: 0.0.40
codegen_flags: <defaults>
</compile_context>

<pallas_src>
import jax
import jax.numpy as jnp
from jax.experimental import pallas as pl
from jax.experimental.pallas import tpu as pltpu


def _round_up(v, m):
    return ((v + m - 1) // m) * m


def _fc_kernel(x_ref, w_ref, b_ref, o_ref, acc_ref):
    """One (tm, tn) output tile of y = x @ W + b, accumulated over the K grid axis."""
    k = pl.program_id(2)

    prod = jnp.dot(x_ref[...], w_ref[...], preferred_element_type=jnp.float32)

    @pl.when(k == 0)
    def _first():
        acc_ref[...] = prod          # direct write: no zero-fill, no += of zeros

    @pl.when(k > 0)
    def _rest():
        acc_ref[...] += prod

    @pl.when(k == pl.num_programs(2) - 1)
    def _finalize():
        # Bias added once per output tile, off the K-loop critical path.
        o_ref[...] = (acc_ref[...] + b_ref[...]).astype(o_ref.dtype)


def _vmem_limit_bytes():
    # Generation-aware scoped-VMEM budget with headroom:
    # v7x has 64 MiB physical VMEM per TC, v5e/v6e have 128 MiB.
    try:
        info = pltpu.get_tpu_info()
        cap = getattr(info, "vmem_capacity_bytes", 64 * 1024 * 1024)
    except Exception:  # e.g. interpret mode / CPU tracing
        cap = 64 * 1024 * 1024
    return max(32 * 1024 * 1024, min(int(cap * 3 // 4), 96 * 1024 * 1024))


def fc_layer(x, weight, bias, *, use_activation=True, mxu_dtype=jnp.bfloat16,
             tm=None, tn=None, tk=None, out_dtype=None):
    """Fused FCLayer forward: dropout(eval, identity) -> [tanh] -> Linear.

    Args:
      x:      (batch, input_dim) float32
      weight: (input_dim, output_dim) float32 (transposed vs. PyTorch layout)
      bias:   (output_dim,) float32
    Returns:
      (batch, output_dim), dtype of x unless out_dtype is given.
    """
    M, K = x.shape
    Kw, N = weight.shape
    assert Kw == K and bias.shape == (N,)
    out_dtype = x.dtype if out_dtype is None else out_dtype

    # -- hoisted prologue: dropout(identity) -> tanh -> MXU-dtype cast -------
    # Single fused mem-bound XLA pass; kernel streams bf16 x tiles from HBM.
    xt = jnp.tanh(x) if use_activation else x
    xt = xt.astype(mxu_dtype)
    # NOTE: with static weights under jit, this cast/pad is hoisted/cached by
    # XLA; callers may also pre-cast the weight once and pass it in.
    wt = weight.astype(mxu_dtype)

    # -- tile selection -------------------------------------------------------
    Mp8, N128, K128 = _round_up(M, 8), _round_up(N, 128), _round_up(K, 128)
    # tm covers all of M when it fits: single i tile => W streamed exactly once
    # (the dominant lever in the small-batch, weight-bandwidth-bound regime).
    tm = min(512, Mp8) if tm is None else min(tm, Mp8)
    tn = min(512, N128) if tn is None else min(tn, N128)
    tk = min(2048, K128) if tk is None else min(tk, K128)
    tm = _round_up(tm, 8)
    tn = _round_up(tn, 128)
    tk = _round_up(tk, 128)
    Mp, Np, Kp = _round_up(M, tm), _round_up(N, tn), _round_up(K, tk)

    # v7x megacore: keep >= 2 parallel blocks so both TensorCores get work.
    if Mp // tm == 1 and Np // tn == 1 and Np >= 256 and (Np // 2) % 128 == 0:
        tn = Np // 2

    # -- pad only when not already tile-aligned ------------------------------
    xp = xt if (M, K) == (Mp, Kp) else (
        jnp.zeros((Mp, Kp), mxu_dtype).at[:M, :K].set(xt))
    wp = wt if (K, N) == (Kp, Np) else (
        jnp.zeros((Kp, Np), mxu_dtype).at[:K, :N].set(wt))
    bf = bias.astype(jnp.float32)
    bp = bf.reshape(1, N) if N == Np else (
        jnp.zeros((1, Np), jnp.float32).at[0, :N].set(bf))

    grid = (Mp // tm, Np // tn, Kp // tk)

    isz = jnp.dtype(mxu_dtype).itemsize
    cost = pl.CostEstimate(
        flops=int(2 * Mp * Np * Kp),
        transcendentals=0,  # tanh hoisted into the XLA prologue
        bytes_accessed=int(
            Mp * Kp * isz * grid[1]        # x streamed once per N tile
            + Kp * Np * isz * grid[0]      # W streamed once per M tile
            + Np * 4 * grid[0]             # bias per M tile
            + Mp * Np * jnp.dtype(out_dtype).itemsize
        ),
    )

    out_p = pl.pallas_call(
        _fc_kernel,
        out_shape=jax.ShapeDtypeStruct((Mp, Np), out_dtype),
        grid_spec=pltpu.PrefetchScalarGridSpec(
            num_scalar_prefetch=0,
            grid=grid,
            in_specs=[
                pl.BlockSpec((tm, tk), lambda i, j, k: (i, k)),
                pl.BlockSpec((tk, tn), lambda i, j, k: (k, j)),
                pl.BlockSpec((1, tn), lambda i, j, k: (0, j)),
            ],
            out_specs=pl.BlockSpec((tm, tn), lambda i, j, k: (i, j)),
            scratch_shapes=[pltpu.VMEM((tm, tn), jnp.float32)],
        ),
        compiler_params=pltpu.CompilerParams(
            dimension_semantics=("parallel", "parallel", "arbitrary"),
            vmem_limit_bytes=_vmem_limit_bytes(),
        ),
        cost_estimate=cost,
    )(xp, wp, bp)

    if (Mp, Np) == (M, N):
        return out_p
    return out_p[:M, :N]


if __name__ == "__main__":
    key = jax.random.PRNGKey(0)
    k_x, k_w, k_b, k_x2 = jax.random.split(key, 4)

    batch, input_dim, output_dim = 160, 384, 256
    x = jax.random.normal(k_x, (batch, input_dim), dtype=jnp.float32)
    bound = 1.0 / (input_dim ** 0.5)
    weight = jax.random.uniform(
        k_w, (input_dim, output_dim), minval=-bound, maxval=bound,
        dtype=jnp.float32)
    bias = jax.random.uniform(
        k_b, (output_dim,), minval=-bound, maxval=bound, dtype=jnp.float32)

    ref = jnp.tanh(x) @ weight + bias

    # Default tiles: single i tile (weight streamed once), single K step,
    # N split into two j tiles for v7x megacore.
    out = jax.block_until_ready(fc_layer(x, weight, bias, use_activation=True))
    assert out.shape == (batch, output_dim)
    # bf16 MXU operands, f32 accumulation -> relaxed tolerance vs f32 reference.
    assert jnp.allclose(out, ref, atol=2e-2, rtol=2e-2), float(
        jnp.max(jnp.abs(out - ref)))

    # Explicit small tiles: exercises a real multi-step (M, N, K) grid and the
    # K-accumulator first-write / accumulate / finalize path.
    out_t = jax.block_until_ready(
        fc_layer(x, weight, bias, use_activation=True, tm=64, tn=128, tk=128))
    assert jnp.allclose(out_t, ref, atol=2e-2, rtol=2e-2), float(
        jnp.max(jnp.abs(out_t - ref)))

    # Tiny / ragged shapes: exercises the zero-pad + slice path and
    # use_activation=False (identity dropout, no tanh).
    x2 = jax.random.normal(k_x2, (8, 33), dtype=jnp.float32)
    w2 = jax.random.normal(k_w, (33, 20), dtype=jnp.float32) * 0.1
    b2 = jax.random.normal(k_b, (20,), dtype=jnp.float32) * 0.1
    out2 = jax.block_until_ready(fc_layer(x2, w2, b2, use_activation=False))
    ref2 = x2 @ w2 + b2
    assert out2.shape == (8, 20)
    assert jnp.allclose(out2, ref2, atol=2e-2, rtol=2e-2)

    print("KERNEL_OK")
</pallas_src>

<mosaic_0001>
module attributes {stable_mosaic.version = 11 : i64} {
  func.func @_fc_kernel(%arg0: i32, %arg1: i32, %arg2: i32, %arg3: memref<160x384xbf16, #tpu.memory_space<vmem>>, %arg4: memref<384x128xbf16, #tpu.memory_space<vmem>>, %arg5: memref<1x128xf32, #tpu.memory_space<vmem>>, %arg6: memref<160x128xf32, #tpu.memory_space<vmem>>, %arg7: memref<160x128xf32, #tpu.memory_space<vmem>>) attributes {dimension_semantics = [#tpu.dimension_semantics<parallel>, #tpu.dimension_semantics<parallel>, #tpu.dimension_semantics<arbitrary>], iteration_bounds = array<i64: 1, 2, 1>, scalar_prefetch = 0 : i64, scratch_operands = 1 : i64, tpu.core_type = #tpu.core_type<tc>, window_params = [{transform_indices = @transform_0, window_bounds = array<i64: 160, 384>}, {transform_indices = @transform_1, window_bounds = array<i64: 384, 128>}, {transform_indices = @transform_2, window_bounds = array<i64: 1, 128>}, {transform_indices = @transform_3, window_bounds = array<i64: 160, 128>}]} {
    %c0 = arith.constant 0 : index
    %c0_0 = arith.constant 0 : index
    %0 = vector.load %arg3[%c0, %c0_0] : memref<160x384xbf16, #tpu.memory_space<vmem>>, vector<160x384xbf16>
    %c0_1 = arith.constant 0 : index
    %c0_2 = arith.constant 0 : index
    %1 = vector.load %arg4[%c0_1, %c0_2] : memref<384x128xbf16, #tpu.memory_space<vmem>>, vector<384x128xbf16>
    %cst = arith.constant dense<0.000000e+00> : vector<160x128xf32>
    %2 = tpu.matmul %0, %1, %cst {dimension_numbers = #tpu.dot_dimension_numbers<[1], [0], [0], [1], [0, 0, 1, 1], [], []>} : vector<160x384xbf16>, vector<384x128xbf16>, vector<160x128xf32> -> vector<160x128xf32>
    %c0_i32 = arith.constant 0 : i32
    %3 = arith.cmpi eq, %arg2, %c0_i32 : i32
    %4 = arith.extui %3 : i1 to i32
    %c0_i32_3 = arith.constant 0 : i32
    %5 = arith.cmpi ne, %4, %c0_i32_3 : i32
    scf.if %5 {
      %c0_8 = arith.constant 0 : index
      %c0_9 = arith.constant 0 : index
      %12 = vector.load %arg7[%c0_8, %c0_9] : memref<160x128xf32, #tpu.memory_space<vmem>>, vector<160x128xf32>
      tpu.vector_store %arg7[%c0_8, %c0_9], %2 {strides = array<i32>} : memref<160x128xf32, #tpu.memory_space<vmem>>, vector<160x128xf32>,
    } else {
    }
    %c0_i32_4 = arith.constant 0 : i32
    %6 = arith.cmpi sgt, %arg2, %c0_i32_4 : i32
    %7 = arith.extui %6 : i1 to i32
    %c0_i32_5 = arith.constant 0 : i32
    %8 = arith.cmpi ne, %7, %c0_i32_5 : i32
    scf.if %8 {
      %c0_8 = arith.constant 0 : index
      %c0_9 = arith.constant 0 : index
      %12 = vector.load %arg7[%c0_8, %c0_9] : memref<160x128xf32, #tpu.memory_space<vmem>>, vector<160x128xf32>
      %13 = arith.addf %12, %2 : vector<160x128xf32>
      %c0_10 = arith.constant 0 : index
      %c0_11 = arith.constant 0 : index
      %14 = vector.load %arg7[%c0_10, %c0_11] : memref<160x128xf32, #tpu.memory_space<vmem>>, vector<160x128xf32>
      tpu.vector_store %arg7[%c0_10, %c0_11], %13 {strides = array<i32>} : memref<160x128xf32, #tpu.memory_space<vmem>>, vector<160x128xf32>,
    } else {
    }
    %c0_i32_6 = arith.constant 0 : i32
    %9 = arith.cmpi eq, %arg2, %c0_i32_6 : i32
    %10 = arith.extui %9 : i1 to i32
    %c0_i32_7 = arith.constant 0 : i32
    %11 = arith.cmpi ne, %10, %c0_i32_7 : i32
    scf.if %11 {
      %c0_8 = arith.constant 0 : index
      %c0_9 = arith.constant 0 : index
      %12 = vector.load %arg7[%c0_8, %c0_9] : memref<160x128xf32, #tpu.memory_space<vmem>>, vector<160x128xf32>
      %c0_10 = arith.constant 0 : index
      %c0_11 = arith.constant 0 : index
      %13 = vector.load %arg5[%c0_10, %c0_11] : memref<1x128xf32, #tpu.memory_space<vmem>>, vector<1x128xf32>
      %14 = vector.broadcast %13 : vector<1x128xf32> to vector<160x128xf32>
      %15 = arith.addf %12, %14 : vector<160x128xf32>
      %c0_12 = arith.constant 0 : index
      %c0_13 = arith.constant 0 : index
      %16 = vector.load %arg6[%c0_12, %c0_13] : memref<160x128xf32, #tpu.memory_space<vmem>>, vector<160x128xf32>
      tpu.vector_store %arg6[%c0_12, %c0_13], %15 {strides = array<i32>} : memref<160x128xf32, #tpu.memory_space<vmem>>, vector<160x128xf32>,
    } else {
    }
    return
  }
  func.func @transform_0(%arg0: i32, %arg1: i32, %arg2: i32) -> (i32, i32) {
    %c0_i32 = arith.constant 0 : i32
    return %arg0, %arg2 : i32, i32
  }
  func.func @transform_1(%arg0: i32, %arg1: i32, %arg2: i32) -> (i32, i32) {
    %c0_i32 = arith.constant 0 : i32
    return %arg2, %arg1 : i32, i32
  }
  func.func @transform_2(%arg0: i32, %arg1: i32, %arg2: i32) -> (i32, i32) {
    %c0_i32 = arith.constant 0 : i32
    %c0_i32_0 = arith.constant 0 : i32
    return %c0_i32, %arg1 : i32, i32
  }
  func.func @transform_3(%arg0: i32, %arg1: i32, %arg2: i32) -> (i32, i32) {
    %c0_i32 = arith.constant 0 : i32
    return %arg0, %arg1 : i32, i32
  }
}

</mosaic_0001>

<llo_original>
// kernel: tpu_custom_call.1
$region0: #{tpu_custom_call.1}
  #allocation0 [shape = 'u32[]', space=smem, size = 0x4, offset = 0x4, fixed_abs, tag = 'smem constant byte address 0x4 - core index']
  #allocation1 [shape = 'u32[144,128]{1,0:T(1,128)}', space=vmem, size = 0x12000, scoped, tag = 'internal scratch']
  #allocation2 [shape = 'f32[160,128]{1,0:T(8,128)}', space=vmem, size = 0x14000, scoped, tag = 'scratch operand']
  %s0 = inlined_call_operand.hbm [shape: bf16[160,384], index: 0, kind: input, shape index: {}]
  %s1 = inlined_call_operand.hbm [shape: bf16[384,256], index: 1, kind: input, shape index: {}]
  %s2 = inlined_call_operand.vmem [shape: f32[1,256], index: 2, kind: input, shape index: {}]
  %s3 = inlined_call_operand.hbm [shape: f32[160,256], index: 3, kind: output, shape index: {}]
  %s4 = sld [smem:[#allocation0]]
  $region65: #{tpu_custom_call.1} parent=0
    _
  %s6 = ssub.s32 1, %s4
  %s7 = scalar_select 0, %s6, %s4
  $region1: #{tpu_custom_call.1} parent=0
    #allocation3 [shape = 'u8[122880]{0}', space=vmem, size = 0x1e000, scoped, tag = 'input window, operand 0, single buffered']
    #allocation4 [shape = 's32[2]{0}', space=sflag, size = 0x8, scoped, tag = 'scoped memory for tpu_custom_call.1']
    #allocation5 [shape = 's32[2]{0}', space=sflag, size = 0x8, scoped, tag = 'scoped memory for tpu_custom_call.1']
    #allocation6 [shape = 'u8[196608]{0}', space=vmem, size = 0x30000, scoped, tag = 'input window, operand 1']
    #allocation7 [shape = 's32[2]{0}', space=sflag, size = 0x8, scoped, tag = 'scoped memory for tpu_custom_call.1']
    #allocation8 [shape = 'u8[163840]{0}', space=vmem, size = 0x28000, scoped, tag = 'output window, operand 0']
    %8 = vsyncpa [#allocation4], 0
    %9 = vsyncpa [#allocation7], 0
    %s10 = scalar_lea.sflag [#allocation7], 1
    %11 = vsyncpa %s10, 0
    %12 = vsyncpa [#allocation5], 0
    %s13 = scalar_lea.sflag [#allocation5], 1
    %14 = vsyncpa %s13, 0
    loop: start=0, step=1, limit=4
    $region2: #{tpu_custom_call.1} parent=1 // loop_pre_header
      _
    $region3: #{tpu_custom_call.1} parent=1 // loop_header
      %s16 = sphi 0, %s20
      %p17 = scmp.ge.s32.totalorder %s16, 4
      %s23 = sphi 0, %s42
      %s24 = sphi 0, %s38
      %s25 = sphi 0, %s34
      %s26 = sphi 0, %s23
      %s27 = sphi 0, %s24
      %s28 = sphi 0, %s25
      %s29 = sphi 0, %s26
      %s30 = sphi 0, %s27
      %s31 = sphi 0, %s28
      %s47 = sphi 0, %s49
      %s50 = sphi 0, %s47
      %s51 = sphi 0, %s50
      %s67 = sphi 0, %s51
      %s75 = sphi 0, %s77
      %s78 = sphi 0, %s75
      %s79 = sphi 0, %s78
      %s95 = sphi 0, %s79
      %s101 = sphi 0, %s103
      %s104 = sphi 0, %s101
      %s105 = sphi 0, %s104
      %s121 = sphi 0, %s105
      %s129 = sphi 0, %s131
      %s132 = sphi 0, %s129
      %s133 = sphi 0, %s132
      %s149 = sphi 0, %s133
    $region4: #{tpu_custom_call.1} parent=1 // loop_header_branch
      %19 = sbr.rel (%p17) target = $region8
    $region5: #{tpu_custom_call.1} parent=1 // loop_body
      %s21 = ssub.s32 %s16, 1
      %s22 = ssub.s32 %s16, 2
      %s32 = sadd.s32 1, %s25
      %p33 = scmp.ge.s32.totalorder %s32, 1
      %s34 = scalar_select %p33, 0, %s32
      %s35 = sadd.s32 1, %s24
      %s36 = scalar_select %p33, %s35, %s24
      %p37 = scmp.ge.s32.totalorder %s36, 2
      %s38 = scalar_select %p37, 0, %s36
      %s39 = sadd.s32 1, %s23
      %s40 = scalar_select %p37, %s39, %s23
      %p41 = scmp.ge.s32.totalorder %s40, 1
      %s42 = scalar_select %p41, 0, %s40
      %s43 = ssub.s32 %s23, %s42
      %s44 = ssub.s32 %s25, %s34
      %s45 = sor.u32 %s43, %s44
      %p46 = scmp.eq.s32.totalorder %s45, 0
      %s48 = sadd.s32 %s47, 1
      %s49 = scalar_select %p46, %s47, %s48
      %p52 = pneg %p46
      %p53 = scmp.eq.s32.totalorder %s16, 1
      %p54 = por %p52, %p53
      %p55 = scmp.ne.s32.totalorder %s47, %s50
      %p56 = scmp.eq.s32.totalorder %s16, 0
      %p57 = por %p55, %p56
      %p58 = scmp.ne.s32.totalorder %s47, %s50
      %p59 = scmp.eq.s32.totalorder %s21, 1
      %p60 = por %p58, %p59
      %p61 = scmp.ne.s32.totalorder %s50, %s51
      %p62 = scmp.eq.s32.totalorder %s21, 0
      %p63 = por %p61, %p62
      %p64 = scmp.ne.s32.totalorder %s50, %s51
      %p65 = scmp.eq.s32.totalorder %s22, 1
      %p66 = por %p64, %p65
      %p68 = scmp.ne.s32.totalorder %s51, %s67
      %p69 = scmp.eq.s32.totalorder %s22, 0
      %p70 = por %p68, %p69
      %s71 = ssub.s32 %s25, %s34
      %s72 = ssub.s32 %s24, %s38
      %s73 = sor.u32 %s71, %s72
      %p74 = scmp.eq.s32.totalorder %s73, 0
      %s76 = sadd.s32 %s75, 1
      %s77 = scalar_select %p74, %s75, %s76
      %p80 = pneg %p74
      %p81 = scmp.eq.s32.totalorder %s16, 1
      %p82 = por %p80, %p81
      %p83 = scmp.ne.s32.totalorder %s75, %s78
      %p84 = scmp.eq.s32.totalorder %s16, 0
      %p85 = por %p83, %p84
      %p86 = scmp.ne.s32.totalorder %s75, %s78
      %p87 = scmp.eq.s32.totalorder %s21, 1
      %p88 = por %p86, %p87
      %p89 = scmp.ne.s32.totalorder %s78, %s79
      %p90 = scmp.eq.s32.totalorder %s21, 0
      %p91 = por %p89, %p90
      %p92 = scmp.ne.s32.totalorder %s78, %s79
      %p93 = scmp.eq.s32.totalorder %s22, 1
      %p94 = por %p92, %p93
      %p96 = scmp.ne.s32.totalorder %s79, %s95
      %p97 = scmp.eq.s32.totalorder %s22, 0
      %p98 = por %p96, %p97
      %s99 = ssub.s32 %s24, %s38
      %p100 = scmp.eq.s32.totalorder %s99, 0
      %s102 = sadd.s32 %s101, 1
      %s103 = scalar_select %p100, %s101, %s102
      %p106 = pneg %p100
      %p107 = scmp.eq.s32.totalorder %s16, 1
      %p108 = por %p106, %p107
      %p109 = scmp.ne.s32.totalorder %s101, %s104
      %p110 = scmp.eq.s32.totalorder %s16, 0
      %p111 = por %p109, %p110
      %p112 = scmp.ne.s32.totalorder %s101, %s104
      %p113 = scmp.eq.s32.totalorder %s21, 1
      %p114 = por %p112, %p113
      %p115 = scmp.ne.s32.totalorder %s104, %s105
      %p116 = scmp.eq.s32.totalorder %s21, 0
      %p117 = por %p115, %p116
      %p118 = scmp.ne.s32.totalorder %s104, %s105
      %p119 = scmp.eq.s32.totalorder %s22, 1
      %p120 = por %p118, %p119
      %p122 = scmp.ne.s32.totalorder %s105, %s121
      %p123 = scmp.eq.s32.totalorder %s22, 0
      %p124 = por %p122, %p123
      %s125 = ssub.s32 %s23, %s42
      %s126 = ssub.s32 %s24, %s38
      %s127 = sor.u32 %s125, %s126
      %p128 = scmp.eq.s32.totalorder %s127, 0
      %s130 = sadd.s32 %s129, 1
      %s131 = scalar_select %p128, %s129, %s130
      %p134 = pneg %p128
      %p135 = scmp.eq.s32.totalorder %s16, 1
      %p136 = por %p134, %p135
      %p137 = scmp.ne.s32.totalorder %s129, %s132
      %p138 = scmp.eq.s32.totalorder %s16, 0
      %p139 = por %p137, %p138
      %p140 = scmp.ne.s32.totalorder %s129, %s132
      %p141 = scmp.eq.s32.totalorder %s21, 1
      %p142 = por %p140, %p141
      %p143 = scmp.ne.s32.totalorder %s132, %s133
      %p144 = scmp.eq.s32.totalorder %s21, 0
      %p145 = por %p143, %p144
      %p146 = scmp.ne.s32.totalorder %s132, %s133
      %p147 = scmp.eq.s32.totalorder %s22, 1
      %p148 = por %p146, %p147
      %p150 = scmp.ne.s32.totalorder %s133, %s149
      %p151 = scmp.eq.s32.totalorder %s22, 0
      %p152 = por %p150, %p151
      %p153 = scmp.le.s32.totalorder 1, %s16
      %p154 = scmp.lt.s32.totalorder %s16, 3
      %p155 = pnand %p153, %p154
      %p156 = pneg %p155
      // Predicated region
      $region9: #{tpu_custom_call.1} parent=5 // pred_check
        _
      $region10: #{tpu_custom_call.1} parent=5 // pred_check_branch
        %158 = sbr.rel (%p155) target = $region12
      $region11: #{tpu_custom_call.1} parent=5 // pred_region
        %s159 = ssub.s32 %s16, 1
        // Predicated region
        $region13: #{tpu_custom_call.1} parent=11 // pred_check
          %p160 = pneg %p63
        $region14: #{tpu_custom_call.1} parent=11 // pred_check_branch
          %162 = sbr.rel (%p160) target = $region16
        $region15: #{tpu_custom_call.1} parent=11 // pred_region
          %s163 = smul.u32 20, %s26
          %s164 = smul.u32 3, %s28
          %s166 = ssub.s32 3840, 3840
          %167 = vsyncadd [#allocation4], %s166
          %s168 = smul.addr %s163, 3
          %s169 = sadd.s32 %s164, %s168
          %s170 = smul.addr %s169, 64
          %s171 = scalar_lea.hbm %s0, %s170
          %s172 = sshll.u32 [#allocation3], 4
          %s173 = int_to_ptr.vmem [resolvable:$true] %s172
          %178 = dma.hbm_to_vmem [thread:$0]  %s171, 3840, %s173, [#allocation4], 192, 192, 12
        $region16: #{tpu_custom_call.1} parent=11 // pred_fallthru
          _
      $region12: #{tpu_custom_call.1} parent=5 // pred_fallthru
        _
      %p179 = scmp.lt.s32.totalorder %s16, 2
      // Predicated region
      $region17: #{tpu_custom_call.1} parent=5 // pred_check
        %p180 = pneg %p179
      $region18: #{tpu_custom_call.1} parent=5 // pred_check_branch
        %182 = sbr.rel (%p180) target = $region20
      $region19: #{tpu_custom_call.1} parent=5 // pred_region
        // Predicated region
        $region21: #{tpu_custom_call.1} parent=19 // pred_check
          %p183 = pneg %p85
        $region22: #{tpu_custom_call.1} parent=19 // pred_check_branch
          %185 = sbr.rel (%p183) target = $region24
        $region23: #{tpu_custom_call.1} parent=19 // pred_region
          %s186 = sand.u32 %s75, 1
          %s187 = scalar_lea.sflag [#allocation7], %s186
          %s188 = sand.u32 %s75, 1
          %s189 = smul.addr %s188, 192
          %s190 = scalar_lea.vmem [#allocation6], %s189
          %s191 = smul.u32 48, %s25
          %s193 = ssub.s32 3072, 3072
          %194 = vsyncadd %s187, %s193
          %s195 = smul.addr %s191, 2
          %s196 = sadd.s32 %s24, %s195
          %s197 = smul.addr %s196, 64
          %s198 = scalar_lea.hbm %s1, %s197
          %s199 = sshll.u32 %s190, 4
          %s200 = int_to_ptr.vmem [resolvable:$true] %s199
          %205 = dma.hbm_to_vmem [thread:$0]  %s198, 3072, %s200, %s187, 128, 64, 4
        $region24: #{tpu_custom_call.1} parent=19 // pred_fallthru
          _
        // Predicated region
        $region25: #{tpu_custom_call.1} parent=19 // pred_check
          %p206 = pneg %p111
        $region26: #{tpu_custom_call.1} parent=19 // pred_check_branch
          %208 = sbr.rel (%p206) target = $region28
        $region27: #{tpu_custom_call.1} parent=19 // pred_region
          %p209 = scmp.lt.s32.totalorder %s24, 1
          %s210 = scalar_select %p209, %s24, 1
          %s211 = scalar_lea.vmem %s2, %s210
        $region28: #{tpu_custom_call.1} parent=19 // pred_fallthru
          _
      $region20: #{tpu_custom_call.1} parent=5 // pred_fallthru
        _
      %p212 = scmp.le.s32.totalorder 1, %s16
      %p213 = scmp.lt.s32.totalorder %s16, 3
      %p214 = pnand %p212, %p213
      %p215 = pneg %p214
      // Predicated region
      $region29: #{tpu_custom_call.1} parent=5 // pred_check
        _
      $region30: #{tpu_custom_call.1} parent=5 // pred_check_branch
        %217 = sbr.rel (%p214) target = $region32
      $region31: #{tpu_custom_call.1} parent=5 // pred_region
        %s218 = ssub.s32 %s16, 1
        // Predicated region
        $region33: #{tpu_custom_call.1} parent=31 // pred_check
          %p219 = pneg %p63
        $region34: #{tpu_custom_call.1} parent=31 // pred_check_branch
          %221 = sbr.rel (%p219) target = $region36
        $region35: #{tpu_custom_call.1} parent=31 // pred_region
          %222 = dma.done [#allocation4], 3840
        $region36: #{tpu_custom_call.1} parent=31 // pred_fallthru
          _
        %s223 = sand.u32 %s78, 1
        %s224 = scalar_lea.sflag [#allocation7], %s223
        %s225 = sand.u32 %s78, 1
        %s226 = smul.addr %s225, 192
        %s227 = scalar_lea.vmem [#allocation6], %s226
        // Predicated region
        $region37: #{tpu_custom_call.1} parent=31 // pred_check
          %p228 = pneg %p91
        $region38: #{tpu_custom_call.1} parent=31 // pred_check_branch
          %230 = sbr.rel (%p228) target = $region40
        $region39: #{tpu_custom_call.1} parent=31 // pred_region
          %231 = dma.done %s224, 3072
        $region40: #{tpu_custom_call.1} parent=31 // pred_fallthru
          _
        %p232 = pneg %p63
        %p233 = pneg %p60
        %s234 = sand.u32 %s78, 1
        %s235 = scalar_lea.sflag [#allocation7], %s234
        %s236 = sand.u32 %s78, 1
        %s237 = smul.addr %s236, 192
        %s238 = scalar_lea.vmem [#allocation6], %s237
        %p239 = pneg %p91
        %p240 = pneg %p88
        %p241 = scmp.lt.s32.totalorder %s27, 1
        %s242 = scalar_select %p241, %s27, 1
        %s243 = scalar_lea.vmem %s2, %s242
        %p244 = pneg %p117
        %p245 = pneg %p114
        %p246 = pneg %p145
        %p247 = pneg %p142
        %s248 = sand.u32 %s132, 1
        %s249 = scalar_lea.sflag [#allocation5], %s248
        %s250 = sand.u32 %s132, 1
        %s251 = smul.addr %s250, 160
        %s252 = scalar_lea.vmem [#allocation8], %s251
        %s253 = smul.u32 20, %s26
        %s254 = smul.u32 3, %s28
        %s255 = smul.u32 48, %s28
        %p256 = scmp.lt.s32.totalorder %s27, 1
        %s257 = scalar_select %p256, %s27, 1
        %s258 = scalar_lea.vmem %s2, %s257
        %s259 = smul.u32 20, %s26
        %v261 = vld [vmem:[#allocation3] sm:$0xff]
        %v262 = vld [vmem:[#allocation3 + $0x8] sm:$0xf]
        %v263 = vld [vmem:[#allocation3 + $0xc] sm:$0xff]
        %v264 = vld [vmem:[#allocation3 + $0x14] sm:$0xf]
        %v265 = vld [vmem:[#allocation3 + $0x18] sm:$0xff]
        %v266 = vld [vmem:[#allocation3 + $0x20] sm:$0xf]
        %v267 = vld [vmem:[#allocation3 + $0x24] sm:$0xff]
        %v268 = vld [vmem:[#allocation3 + $0x2c] sm:$0xf]
        %v269 = vld [vmem:[#allocation3 + $0x30] sm:$0xff]
        %v270 = vld [vmem:[#allocation3 + $0x38] sm:$0xf]
        %v271 = vld [vmem:[#allocation3 + $0x3c] sm:$0xff]
        %v272 = vld [vmem:[#allocation3 + $0x44] sm:$0xf]
        %v273 = vld [vmem:[#allocation3 + $0x48] sm:$0xff]
        %v274 = vld [vmem:[#allocation3 + $0x50] sm:$0xf]
        %v275 = vld [vmem:[#allocation3 + $0x54] sm:$0xff]
        %v276 = vld [vmem:[#allocation3 + $0x5c] sm:$0xf]
        %v277 = vld [vmem:[#allocation3 + $0x60] sm:$0xff]
        %v278 = vld [vmem:[#allocation3 + $0x68] sm:$0xf]
        %v279 = vld [vmem:[#allocation3 + $0x6c] sm:$0xff]
        %v280 = vld [vmem:[#allocation3 + $0x74] sm:$0xf]
        %v281 = vld [vmem:[#allocation3 + $0x78] sm:$0xff]
        %v282 = vld [vmem:[#allocation3 + $0x80] sm:$0xf]
        %v283 = vld [vmem:[#allocation3 + $0x84] sm:$0xff]
        %v284 = vld [vmem:[#allocation3 + $0x8c] sm:$0xf]
        %v285 = vld [vmem:[#allocation3 + $0x90] sm:$0xff]
        %v286 = vld [vmem:[#allocation3 + $0x98] sm:$0xf]
        %v287 = vld [vmem:[#allocation3 + $0x9c] sm:$0xff]
        %v288 = vld [vmem:[#allocation3 + $0xa4] sm:$0xf]
        %v289 = vld [vmem:[#allocation3 + $0xa8] sm:$0xff]
        %v290 = vld [vmem:[#allocation3 + $0xb0] sm:$0xf]
        %v291 = vld [vmem:[#allocation3 + $0xb4] sm:$0xff]
        %v292 = vld [vmem:[#allocation3 + $0xbc] sm:$0xf]
        %v293 = vld [vmem:[#allocation3 + $0xc0] sm:$0xff]
        %v294 = vld [vmem:[#allocation3 + $0xc8] sm:$0xf]
        %v295 = vld [vmem:[#allocation3 + $0xcc] sm:$0xff]
        %v296 = vld [vmem:[#allocation3 + $0xd4] sm:$0xf]
        %v297 = vld [vmem:[#allocation3 + $0xd8] sm:$0xff]
        %v298 = vld [vmem:[#allocation3 + $0xe0] sm:$0xf]
        %v299 = vld [vmem:[#allocation3 + $0xe4] sm:$0xff]
        %v300 = vld [vmem:[#allocation3 + $0xec] sm:$0xf]
        %v301 = vld [vmem:[%s227] sm:$0xf]
        %v302 = vld [vmem:[%s227 + $0x4] sm:$0xf]
        %v303 = vld [vmem:[%s227 + $0x8] sm:$0xf]
        %v304 = vld [vmem:[%s227 + $0xc] sm:$0xf]
        %v305 = vld [vmem:[%s227 + $0x10] sm:$0xf]
        %v306 = vld [vmem:[%s227 + $0x14] sm:$0xf]
        %v307 = vld [vmem:[%s227 + $0x18] sm:$0xf]
        %v308 = vld [vmem:[%s227 + $0x1c] sm:$0xf]
        %v309 = vld [vmem:[%s227 + $0x20] sm:$0xf]
        %v310 = vld [vmem:[%s227 + $0x24] sm:$0xf]
        %v311 = vld [vmem:[%s227 + $0x28] sm:$0xf]
        %v312 = vld [vmem:[%s227 + $0x2c] sm:$0xf]
        %v313 = vld [vmem:[%s227 + $0x30] sm:$0xf]
        %v314 = vld [vmem:[%s227 + $0x34] sm:$0xf]
        %v315 = vld [vmem:[%s227 + $0x38] sm:$0xf]
        %v316 = vld [vmem:[%s227 + $0x3c] sm:$0xf]
        %v317 = vld [vmem:[%s227 + $0x40] sm:$0xf]
        %v318 = vld [vmem:[%s227 + $0x44] sm:$0xf]
        %v319 = vld [vmem:[%s227 + $0x48] sm:$0xf]
        %v320 = vld [vmem:[%s227 + $0x4c] sm:$0xf]
        %v321 = vld [vmem:[%s227 + $0x50] sm:$0xf]
        %v322 = vld [vmem:[%s227 + $0x54] sm:$0xf]
        %v323 = vld [vmem:[%s227 + $0x58] sm:$0xf]
        %v324 = vld [vmem:[%s227 + $0x5c] sm:$0xf]
        %v325 = vld [vmem:[%s227 + $0x60] sm:$0xf]
        %v326 = vld [vmem:[%s227 + $0x64] sm:$0xf]
        %v327 = vld [vmem:[%s227 + $0x68] sm:$0xf]
        %v328 = vld [vmem:[%s227 + $0x6c] sm:$0xf]
        %v329 = vld [vmem:[%s227 + $0x70] sm:$0xf]
        %v330 = vld [vmem:[%s227 + $0x74] sm:$0xf]
        %v331 = vld [vmem:[%s227 + $0x78] sm:$0xf]
        %v332 = vld [vmem:[%s227 + $0x7c] sm:$0xf]
        %v333 = vld [vmem:[%s227 + $0x80] sm:$0xf]
        %v334 = vld [vmem:[%s227 + $0x84] sm:$0xf]
        %v335 = vld [vmem:[%s227 + $0x88] sm:$0xf]
        %v336 = vld [vmem:[%s227 + $0x8c] sm:$0xf]
        %v337 = vld [vmem:[%s227 + $0x90] sm:$0xf]
        %v338 = vld [vmem:[%s227 + $0x94] sm:$0xf]
        %v339 = vld [vmem:[%s227 + $0x98] sm:$0xf]
        %v340 = vld [vmem:[%s227 + $0x9c] sm:$0xf]
        %v341 = vld [vmem:[%s227 + $0xa0] sm:$0xf]
        %v342 = vld [vmem:[%s227 + $0xa4] sm:$0xf]
        %v343 = vld [vmem:[%s227 + $0xa8] sm:$0xf]
        %v344 = vld [vmem:[%s227 + $0xac] sm:$0xf]
        %v345 = vld [vmem:[%s227 + $0xb0] sm:$0xf]
        %v346 = vld [vmem:[%s227 + $0xb4] sm:$0xf]
        %v347 = vld [vmem:[%s227 + $0xb8] sm:$0xf]
        %v348 = vld [vmem:[%s227 + $0xbc] sm:$0xf]
        %v389 = vunpack.c.l.b16 %v261
        %v390 = vunpack.c.h.b16 %v261
        %v391 = vunpack.c.l.b16 %v262
        %v392 = vunpack.c.l.b16 %v263
        %v393 = vunpack.c.h.b16 %v263
        %v394 = vunpack.c.l.b16 %v264
        %v395 = vunpack.c.l.b16 %v265
        %v396 = vunpack.c.h.b16 %v265
        %v397 = vunpack.c.l.b16 %v266
        %v398 = vunpack.c.l.b16 %v267
        %v399 = vunpack.c.h.b16 %v267
        %v400 = vunpack.c.l.b16 %v268
        %v401 = vunpack.c.l.b16 %v269
        %v402 = vunpack.c.h.b16 %v269
        %v403 = vunpack.c.l.b16 %v270
        %v404 = vunpack.c.l.b16 %v271
        %v405 = vunpack.c.h.b16 %v271
        %v406 = vunpack.c.l.b16 %v272
        %v407 = vunpack.c.l.b16 %v273
        %v408 = vunpack.c.h.b16 %v273
        %v409 = vunpack.c.l.b16 %v274
        %v410 = vunpack.c.l.b16 %v275
        %v411 = vunpack.c.h.b16 %v275
        %v412 = vunpack.c.l.b16 %v276
        %v413 = vunpack.c.l.b16 %v277
        %v414 = vunpack.c.h.b16 %v277
        %v415 = vunpack.c.l.b16 %v278
        %v416 = vunpack.c.l.b16 %v279
        %v417 = vunpack.c.h.b16 %v279
        %v418 = vunpack.c.l.b16 %v280
        %v419 = vunpack.c.l.b16 %v281
        %v420 = vunpack.c.h.b16 %v281
        %v421 = vunpack.c.l.b16 %v282
        %v422 = vunpack.c.l.b16 %v283
        %v423 = vunpack.c.h.b16 %v283
        %v424 = vunpack.c.l.b16 %v284
        %v425 = vunpack.c.l.b16 %v285
        %v426 = vunpack.c.h.b16 %v285
        %v427 = vunpack.c.l.b16 %v286
        %v428 = vunpack.c.l.b16 %v287
        %v429 = vunpack.c.h.b16 %v287
        %v430 = vunpack.c.l.b16 %v288
        %v431 = vunpack.c.l.b16 %v289
        %v432 = vunpack.c.h.b16 %v289
        %v433 = vunpack.c.l.b16 %v290
        %v434 = vunpack.c.l.b16 %v291
        %v435 = vunpack.c.h.b16 %v291
        %v436 = vunpack.c.l.b16 %v292
        %v437 = vunpack.c.l.b16 %v293
        %v438 = vunpack.c.h.b16 %v293
        %v439 = vunpack.c.l.b16 %v294
        %v440 = vunpack.c.l.b16 %v295
        %v441 = vunpack.c.h.b16 %v295
        %v442 = vunpack.c.l.b16 %v296
        %v443 = vunpack.c.l.b16 %v297
        %v444 = vunpack.c.h.b16 %v297
        %v445 = vunpack.c.l.b16 %v298
        %v446 = vunpack.c.l.b16 %v299
        %v447 = vunpack.c.h.b16 %v299
        %v448 = vunpack.c.l.b16 %v300
        %v449 = vpack.c.b16 %v392, %v389
        %v450 = vpack.c.b16 %v393, %v390
        %v451 = vpack.c.b16 %v394, %v391
        %v452 = vpack.c.b16 %v398, %v395
        %v453 = vpack.c.b16 %v399, %v396
        %v454 = vpack.c.b16 %v400, %v397
        %v455 = vpack.c.b16 %v404, %v401
        %v456 = vpack.c.b16 %v405, %v402
        %v457 = vpack.c.b16 %v406, %v403
        %v458 = vpack.c.b16 %v410, %v407
        %v459 = vpack.c.b16 %v411, %v408
        %v460 = vpack.c.b16 %v412, %v409
        %v461 = vpack.c.b16 %v416, %v413
        %v462 = vpack.c.b16 %v417, %v414
        %v463 = vpack.c.b16 %v418, %v415
        %v464 = vpack.c.b16 %v422, %v419
        %v465 = vpack.c.b16 %v423, %v420
        %v466 = vpack.c.b16 %v424, %v421
        %v467 = vpack.c.b16 %v428, %v425
        %v468 = vpack.c.b16 %v429, %v426
        %v469 = vpack.c.b16 %v430, %v427
        %v470 = vpack.c.b16 %v434, %v431
        %v471 = vpack.c.b16 %v435, %v432
        %v472 = vpack.c.b16 %v436, %v433
        %v473 = vpack.c.b16 %v440, %v437
        %v474 = vpack.c.b16 %v441, %v438
        %v475 = vpack.c.b16 %v442, %v439
        %v476 = vpack.c.b16 %v446, %v443
        %v477 = vpack.c.b16 %v447, %v444
        %v478 = vpack.c.b16 %v448, %v445
        %v557 = vunpack.c.l.b16 %v301
        %v558 = vunpack.c.l.b16 %v302
        %v559 = vunpack.c.l.b16 %v303
        %v560 = vunpack.c.l.b16 %v304
        %v561 = vunpack.c.l.b16 %v305
        %v562 = vunpack.c.l.b16 %v306
        %v563 = vunpack.c.l.b16 %v307
        %v564 = vunpack.c.l.b16 %v308
        %v565 = vunpack.c.l.b16 %v309
        %v566 = vunpack.c.l.b16 %v310
        %v567 = vunpack.c.l.b16 %v311
        %v568 = vunpack.c.l.b16 %v312
        %v569 = vunpack.c.l.b16 %v313
        %v570 = vunpack.c.l.b16 %v314
        %v571 = vunpack.c.l.b16 %v315
        %v572 = vunpack.c.l.b16 %v316
        %v573 = vunpack.c.l.b16 %v317
        %v574 = vunpack.c.l.b16 %v318
        %v575 = vunpack.c.l.b16 %v319
        %v576 = vunpack.c.l.b16 %v320
        %v577 = vunpack.c.l.b16 %v321
        %v578 = vunpack.c.l.b16 %v322
        %v579 = vunpack.c.l.b16 %v323
        %v580 = vunpack.c.l.b16 %v324
        %v581 = vunpack.c.l.b16 %v325
        %v582 = vunpack.c.l.b16 %v326
        %v583 = vunpack.c.l.b16 %v327
        %v584 = vunpack.c.l.b16 %v328
        %v585 = vunpack.c.l.b16 %v329
        %v586 = vunpack.c.l.b16 %v330
        %v587 = vunpack.c.l.b16 %v331
        %v588 = vunpack.c.l.b16 %v332
        %v589 = vunpack.c.l.b16 %v333
        %v590 = vunpack.c.l.b16 %v334
        %v591 = vunpack.c.l.b16 %v335
        %v592 = vunpack.c.l.b16 %v336
        %v593 = vunpack.c.l.b16 %v337
        %v594 = vunpack.c.l.b16 %v338
        %v595 = vunpack.c.l.b16 %v339
        %v596 = vunpack.c.l.b16 %v340
        %v597 = vunpack.c.l.b16 %v341
        %v598 = vunpack.c.l.b16 %v342
        %v599 = vunpack.c.l.b16 %v343
        %v600 = vunpack.c.l.b16 %v344
        %v601 = vunpack.c.l.b16 %v345
        %v602 = vunpack.c.l.b16 %v346
        %v603 = vunpack.c.l.b16 %v347
        %v604 = vunpack.c.l.b16 %v348
        %v605 = vpack.c.b16 %v558, %v557
        %v606 = vpack.c.b16 %v560, %v559
        %v607 = vpack.c.b16 %v562, %v561
        %v608 = vpack.c.b16 %v564, %v563
        %v609 = vpack.c.b16 %v566, %v565
        %v610 = vpack.c.b16 %v568, %v567
        %v611 = vpack.c.b16 %v570, %v569
        %v612 = vpack.c.b16 %v572, %v571
        %v613 = vpack.c.b16 %v574, %v573
        %v614 = vpack.c.b16 %v576, %v575
        %v615 = vpack.c.b16 %v578, %v577
        %v616 = vpack.c.b16 %v580, %v579
        %v617 = vpack.c.b16 %v582, %v581
        %v618 = vpack.c.b16 %v584, %v583
        %v619 = vpack.c.b16 %v586, %v585
        %v620 = vpack.c.b16 %v588, %v587
        %v621 = vpack.c.b16 %v590, %v589
        %v622 = vpack.c.b16 %v592, %v591
        %v623 = vpack.c.b16 %v594, %v593
        %v624 = vpack.c.b16 %v596, %v595
        %v625 = vpack.c.b16 %v598, %v597
        %v626 = vpack.c.b16 %v600, %v599
        %v627 = vpack.c.b16 %v602, %v601
        %v628 = vpack.c.b16 %v604, %v603
        %653 = vmatprep.subr.bf16.mxu0 0
        %654 = vmatpush1.bf16.msra.mxu0 %v605
        %655 = vmatprep.subr.bf16.mxu0 0
        %656 = vmatpush1.bf16.msra.mxu0 %v606
        %657 = vmatprep.subr.bf16.mxu0 0
        %658 = vmatpush1.bf16.msra.mxu0 %v607
        %659 = vmatprep.subr.bf16.mxu0 0
        %660 = vmatpush1.bf16.msra.mxu0 %v608
        %661 = vmatprep.subr.bf16.mxu0 0
        %662 = vmatpush1.bf16.msra.mxu0 %v609
        %663 = vmatprep.subr.bf16.mxu0 0
        %664 = vmatpush1.bf16.msra.mxu0 %v610
        %665 = vmatprep.subr.bf16.mxu0 0
        %666 = vmatpush1.bf16.msra.mxu0 %v611
        %667 = vmatprep.subr.bf16.mxu0 0
        %668 = vmatpush1.bf16.msra.mxu0 %v612
        %669 = vmatprep.subr.bf16.mxu0 0
        %670 = vmatpush1.bf16.msra.mxu0 %v613
        %671 = vmatprep.subr.bf16.mxu0 0
        %672 = vmatpush1.bf16.msra.mxu0 %v614
        %673 = vmatprep.subr.bf16.mxu0 0
        %674 = vmatpush1.bf16.msra.mxu0 %v615
        %675 = vmatprep.subr.bf16.mxu0 0
        %676 = vmatpush1.bf16.msra.mxu0 %v616
        %677 = vmatprep.subr.bf16.mxu0 0
        %678 = vmatpush1.bf16.msra.mxu0 %v617
        %679 = vmatprep.subr.bf16.mxu0 0
        %680 = vmatpush1.bf16.msra.mxu0 %v618
        %681 = vmatprep.subr.bf16.mxu0 0
        %682 = vmatpush1.bf16.msra.mxu0 %v619
        %683 = vmatprep.subr.bf16.mxu0 0
        %684 = vmatpush1.bf16.msra.mxu0 %v620
        %685 = vmatprep.mubr.bf16.mxu0 %v450
        %686 = vmatmul.mubr.bf16.gmra.mrb[0].mxu0 %v449
        %v687 = vpop.f32.mrb[0].mxu0
        %v688 = vadd.f32 0.0, %v687
        %v689 = vpop.f32.mrb[0].mxu0
        %v690 = vpop.f32.mrb[0].mxu0
        %v691 = vadd.f32 0.0, %v690
        %v692 = vpop.f32.mrb[0].mxu0
        %693 = vmatprep.mubr.bf16.mxu0 %v453
        %694 = vmatmul.mubr.bf16.gmra.mrb[0].mxu0 %v452
        %v695 = vpop.f32.mrb[0].mxu0
        %v696 = vadd.f32 0.0, %v695
        %v697 = vpop.f32.mrb[0].mxu0
        %v698 = vpop.f32.mrb[0].mxu0
        %v699 = vadd.f32 0.0, %v698
        %v700 = vpop.f32.mrb[0].mxu0
        %701 = vmatprep.mubr.bf16.mxu0 %v456
        %702 = vmatmul.mubr.bf16.gmra.mrb[0].mxu0 %v455
        %v703 = vpop.f32.mrb[0].mxu0
        %v704 = vadd.f32 0.0, %v703
        %v705 = vpop.f32.mrb[0].mxu0
        %v706 = vpop.f32.mrb[0].mxu0
        %v707 = vadd.f32 0.0, %v706
        %v708 = vpop.f32.mrb[0].mxu0
        %709 = vmatprep.mubr.bf16.mxu0 %v459
        %710 = vmatmul.mubr.bf16.gmra.mrb[0].mxu0 %v458
        %v711 = vpop.f32.mrb[0].mxu0
        %v712 = vadd.f32 0.0, %v711
        %v713 = vpop.f32.mrb[0].mxu0
        %v714 = vpop.f32.mrb[0].mxu0
        %v715 = vadd.f32 0.0, %v714
        %v716 = vpop.f32.mrb[0].mxu0
        %717 = vmatprep.mubr.bf16.mxu0 %v462
        %718 = vmatmul.mubr.bf16.gmra.mrb[0].mxu0 %v461
        %v719 = vpop.f32.mrb[0].mxu0
        %v720 = vadd.f32 0.0, %v719
        %v721 = vpop.f32.mrb[0].mxu0
        %v722 = vpop.f32.mrb[0].mxu0
        %v723 = vadd.f32 0.0, %v722
        %v724 = vpop.f32.mrb[0].mxu0
        %725 = vmatprep.mubr.bf16.mxu0 %v465
        %726 = vmatmul.mubr.bf16.gmra.mrb[0].mxu0 %v464
        %v727 = vpop.f32.mrb[0].mxu0
        %v728 = vadd.f32 0.0, %v727
        %v729 = vpop.f32.mrb[0].mxu0
        %v730 = vpop.f32.mrb[0].mxu0
        %v731 = vadd.f32 0.0, %v730
        %v732 = vpop.f32.mrb[0].mxu0
        %733 = vmatprep.mubr.bf16.mxu0 %v468
        %734 = vmatmul.mubr.bf16.gmra.mrb[0].mxu0 %v467
        %v735 = vpop.f32.mrb[0].mxu0
        %v736 = vadd.f32 0.0, %v735
        %v737 = vpop.f32.mrb[0].mxu0
        %v738 = vpop.f32.mrb[0].mxu0
        %v739 = vadd.f32 0.0, %v738
        %v740 = vpop.f32.mrb[0].mxu0
        %741 = vmatprep.mubr.bf16.mxu0 %v471
        %742 = vmatmul.mubr.bf16.gmra.mrb[0].mxu0 %v470
        %v743 = vpop.f32.mrb[0].mxu0
        %v744 = vadd.f32 0.0, %v743
        %v745 = vpop.f32.mrb[0].mxu0
        %v746 = vpop.f32.mrb[0].mxu0
        %v747 = vadd.f32 0.0, %v746
        %v748 = vpop.f32.mrb[0].mxu0
        %749 = vmatprep.mubr.bf16.mxu0 %v474
        %750 = vmatmul.mubr.bf16.gmra.mrb[0].mxu0 %v473
        %v751 = vpop.f32.mrb[0].mxu0
        %v752 = vadd.f32 0.0, %v751
        %v753 = vpop.f32.mrb[0].mxu0
        %v754 = vpop.f32.mrb[0].mxu0
        %v755 = vadd.f32 0.0, %v754
        %v756 = vpop.f32.mrb[0].mxu0
        %757 = vmatprep.mubr.bf16.mxu0 %v477
        %758 = vmatmul.mubr.bf16.gmra.mrb[0].mxu0 %v476
        %v759 = vpop.f32.mrb[0].mxu0
        %v760 = vadd.f32 0.0, %v759
        %v761 = vpop.f32.mrb[0].mxu0
        %v762 = vpop.f32.mrb[0].mxu0
        %v763 = vadd.f32 0.0, %v762
        %v764 = vpop.f32.mrb[0].mxu0
        %765 = vdwg.mxu0
        %766 = vmatprep.subr.bf16.mxu0 0
        %767 = vmatpush1.bf16.msra.mxu0 %v621
        %768 = vmatprep.subr.bf16.mxu0 0
        %769 = vmatpush1.bf16.msra.mxu0 %v622
        %770 = vmatprep.subr.bf16.mxu0 0
        %771 = vmatpush1.bf16.msra.mxu0 %v623
        %772 = vmatprep.subr.bf16.mxu0 0
        %773 = vmatpush1.bf16.msra.mxu0 %v624
        %774 = vmatprep.subr.bf16.mxu0 0
        %775 = vmatpush1.bf16.msra.mxu0 %v625
        %776 = vmatprep.subr.bf16.mxu0 0
        %777 = vmatpush1.bf16.msra.mxu0 %v626
        %778 = vmatprep.subr.bf16.mxu0 0
        %779 = vmatpush1.bf16.msra.mxu0 %v627
        %780 = vmatprep.subr.bf16.mxu0 0
        %781 = vmatpush1.bf16.msra.mxu0 %v628
        %782 = vmatprep.subr.bf16.mxu0 0
        %783 = vmatpush1.bf16.msra.mxu0 0
        %784 = vmatprep.subr.bf16.mxu0 0
        %785 = vmatpush1.bf16.msra.mxu0 0
        %786 = vmatprep.subr.bf16.mxu0 0
        %787 = vmatpush1.bf16.msra.mxu0 0
        %788 = vmatprep.subr.bf16.mxu0 0
        %789 = vmatpush1.bf16.msra.mxu0 0
        %790 = vmatprep.subr.bf16.mxu0 0
        %791 = vmatpush1.bf16.msra.mxu0 0
        %792 = vmatprep.subr.bf16.mxu0 0
        %793 = vmatpush1.bf16.msra.mxu0 0
        %794 = vmatprep.subr.bf16.mxu0 0
        %795 = vmatpush1.bf16.msra.mxu0 0
        %796 = vmatprep.subr.bf16.mxu0 0
        %797 = vmatpush1.bf16.msra.mxu0 0
        %798 = vmatprep.mubr.bf16.mxu0 0
        %799 = vmatmul.mubr.bf16.gmra.mrb[0].mxu0 %v451
        %v800 = vpop.f32.mrb[0].mxu0
        %v801 = vadd.f32 %v688, %v800
        %v802 = vpop.f32.mrb[0].mxu0
        %v803 = vpop.f32.mrb[0].mxu0
        %v804 = vadd.f32 %v691, %v803
        %v805 = vpop.f32.mrb[0].mxu0
        %806 = vmatprep.mubr.bf16.mxu0 0
        %807 = vmatmul.mubr.bf16.gmra.mrb[0].mxu0 %v454
        %v808 = vpop.f32.mrb[0].mxu0
        %v809 = vadd.f32 %v696, %v808
        %v810 = vpop.f32.mrb[0].mxu0
        %v811 = vpop.f32.mrb[0].mxu0
        %v812 = vadd.f32 %v699, %v811
        %v813 = vpop.f32.mrb[0].mxu0
        %814 = vmatprep.mubr.bf16.mxu0 0
        %815 = vmatmul.mubr.bf16.gmra.mrb[0].mxu0 %v457
        %v816 = vpop.f32.mrb[0].mxu0
        %v817 = vadd.f32 %v704, %v816
        %v818 = vpop.f32.mrb[0].mxu0
        %v819 = vpop.f32.mrb[0].mxu0
        %v820 = vadd.f32 %v707, %v819
        %v821 = vpop.f32.mrb[0].mxu0
        %822 = vmatprep.mubr.bf16.mxu0 0
        %823 = vmatmul.mubr.bf16.gmra.mrb[0].mxu0 %v460
        %v824 = vpop.f32.mrb[0].mxu0
        %v825 = vadd.f32 %v712, %v824
        %v826 = vpop.f32.mrb[0].mxu0
        %v827 = vpop.f32.mrb[0].mxu0
        %v828 = vadd.f32 %v715, %v827
        %v829 = vpop.f32.mrb[0].mxu0
        %830 = vmatprep.mubr.bf16.mxu0 0
        %831 = vmatmul.mubr.bf16.gmra.mrb[0].mxu0 %v463
        %v832 = vpop.f32.mrb[0].mxu0
        %v833 = vadd.f32 %v720, %v832
        %v834 = vpop.f32.mrb[0].mxu0
        %v835 = vpop.f32.mrb[0].mxu0
        %v836 = vadd.f32 %v723, %v835
        %v837 = vpop.f32.mrb[0].mxu0
        %838 = vmatprep.mubr.bf16.mxu0 0
        %839 = vmatmul.mubr.bf16.gmra.mrb[0].mxu0 %v466
        %v840 = vpop.f32.mrb[0].mxu0
        %v841 = vadd.f32 %v728, %v840
        %v842 = vpop.f32.mrb[0].mxu0
        %v843 = vpop.f32.mrb[0].mxu0
        %v844 = vadd.f32 %v731, %v843
        %v845 = vpop.f32.mrb[0].mxu0
        %846 = vmatprep.mubr.bf16.mxu0 0
        %847 = vmatmul.mubr.bf16.gmra.mrb[0].mxu0 %v469
        %v848 = vpop.f32.mrb[0].mxu0
        %v849 = vadd.f32 %v736, %v848
        %v850 = vpop.f32.mrb[0].mxu0
        %v851 = vpop.f32.mrb[0].mxu0
        %v852 = vadd.f32 %v739, %v851
        %v853 = vpop.f32.mrb[0].mxu0
        %854 = vmatprep.mubr.bf16.mxu0 0
        %855 = vmatmul.mubr.bf16.gmra.mrb[0].mxu0 %v472
        %v856 = vpop.f32.mrb[0].mxu0
        %v857 = vadd.f32 %v744, %v856
        %v858 = vpop.f32.mrb[0].mxu0
        %v859 = vpop.f32.mrb[0].mxu0
        %v860 = vadd.f32 %v747, %v859
        %v861 = vpop.f32.mrb[0].mxu0
        %862 = vmatprep.mubr.bf16.mxu0 0
        %863 = vmatmul.mubr.bf16.gmra.mrb[0].mxu0 %v475
        %v864 = vpop.f32.mrb[0].mxu0
        %v865 = vadd.f32 %v752, %v864
        %v866 = vpop.f32.mrb[0].mxu0
        %v867 = vpop.f32.mrb[0].mxu0
        %v868 = vadd.f32 %v755, %v867
        %v869 = vpop.f32.mrb[0].mxu0
        %870 = vmatprep.mubr.bf16.mxu0 0
        %871 = vmatmul.mubr.bf16.gmra.mrb[0].mxu0 %v478
        %v872 = vpop.f32.mrb[0].mxu0
        %v873 = vadd.f32 %v760, %v872
        %v874 = vpop.f32.mrb[0].mxu0
        %v875 = vpop.f32.mrb[0].mxu0
        %v876 = vadd.f32 %v763, %v875
        %v877 = vpop.f32.mrb[0].mxu0
        %878 = vdwg.mxu0
        %p879 = scmp.eq.s32.totalorder %s28, 0
        // Predicated region
        $region41: #{tpu_custom_call.1} parent=31 // pred_check
          %p880 = pneg %p879
        $region42: #{tpu_custom_call.1} parent=31 // pred_check_branch
          %882 = sbr.rel (%p880) target = $region44
        $region43: #{tpu_custom_call.1} parent=31 // pred_region
          %883 = vst [vmem:[#allocation2] sm:$0xff] %v801
          %884 = vst [vmem:[#allocation2 + $0x8] sm:$0xff] %v804
          %885 = vst [vmem:[#allocation2 + $0x10] sm:$0xff] %v809
          %886 = vst [vmem:[#allocation2 + $0x18] sm:$0xff] %v812
          %887 = vst [vmem:[#allocation2 + $0x20] sm:$0xff] %v817
          %888 = vst [vmem:[#allocation2 + $0x28] sm:$0xff] %v820
          %889 = vst [vmem:[#allocation2 + $0x30] sm:$0xff] %v825
          %890 = vst [vmem:[#allocation2 + $0x38] sm:$0xff] %v828
          %891 = vst [vmem:[#allocation2 + $0x40] sm:$0xff] %v833
          %892 = vst [vmem:[#allocation2 + $0x48] sm:$0xff] %v836
          %893 = vst [vmem:[#allocation2 + $0x50] sm:$0xff] %v841
          %894 = vst [vmem:[#allocation2 + $0x58] sm:$0xff] %v844
          %895 = vst [vmem:[#allocation2 + $0x60] sm:$0xff] %v849
          %896 = vst [vmem:[#allocation2 + $0x68] sm:$0xff] %v852
          %897 = vst [vmem:[#allocation2 + $0x70] sm:$0xff] %v857
          %898 = vst [vmem:[#allocation2 + $0x78] sm:$0xff] %v860
          %899 = vst [vmem:[#allocation2 + $0x80] sm:$0xff] %v865
          %900 = vst [vmem:[#allocation2 + $0x88] sm:$0xff] %v868
          %901 = vst [vmem:[#allocation2 + $0x90] sm:$0xff] %v873
          %902 = vst [vmem:[#allocation2 + $0x98] sm:$0xff] %v876
        $region44: #{tpu_custom_call.1} parent=31 // pred_fallthru
          _
        %p903 = scmp.gt.s32.totalorder %s28, 0
        // Predicated region
        $region45: #{tpu_custom_call.1} parent=31 // pred_check
          %p904 = pneg %p903
        $region46: #{tpu_custom_call.1} parent=31 // pred_check_branch
          %906 = sbr.rel (%p904) target = $region48
        $region47: #{tpu_custom_call.1} parent=31 // pred_region
          %v907 = vld [vmem:[#allocation2] sm:$0xff]
          %v908 = vld [vmem:[#allocation2 + $0x8] sm:$0xff]
          %v909 = vld [vmem:[#allocation2 + $0x10] sm:$0xff]
          %v910 = vld [vmem:[#allocation2 + $0x18] sm:$0xff]
          %v911 = vld [vmem:[#allocation2 + $0x20] sm:$0xff]
          %v912 = vld [vmem:[#allocation2 + $0x28] sm:$0xff]
          %v913 = vld [vmem:[#allocation2 + $0x30] sm:$0xff]
          %v914 = vld [vmem:[#allocation2 + $0x38] sm:$0xff]
          %v915 = vld [vmem:[#allocation2 + $0x40] sm:$0xff]
          %v916 = vld [vmem:[#allocation2 + $0x48] sm:$0xff]
          %v917 = vld [vmem:[#allocation2 + $0x50] sm:$0xff]
          %v918 = vld [vmem:[#allocation2 + $0x58] sm:$0xff]
          %v919 = vld [vmem:[#allocation2 + $0x60] sm:$0xff]
          %v920 = vld [vmem:[#allocation2 + $0x68] sm:$0xff]
          %v921 = vld [vmem:[#allocation2 + $0x70] sm:$0xff]
          %v922 = vld [vmem:[#allocation2 + $0x78] sm:$0xff]
          %v923 = vld [vmem:[#allocation2 + $0x80] sm:$0xff]
          %v924 = vld [vmem:[#allocation2 + $0x88] sm:$0xff]
          %v925 = vld [vmem:[#allocation2 + $0x90] sm:$0xff]
          %v926 = vld [vmem:[#allocation2 + $0x98] sm:$0xff]
          %v927 = vadd.f32 %v907, %v801
          %v928 = vadd.f32 %v908, %v804
          %v929 = vadd.f32 %v909, %v809
          %v930 = vadd.f32 %v910, %v812
          %v931 = vadd.f32 %v911, %v817
          %v932 = vadd.f32 %v912, %v820
          %v933 = vadd.f32 %v913, %v825
          %v934 = vadd.f32 %v914, %v828
          %v935 = vadd.f32 %v915, %v833
          %v936 = vadd.f32 %v916, %v836
          %v937 = vadd.f32 %v917, %v841
          %v938 = vadd.f32 %v918, %v844
          %v939 = vadd.f32 %v919, %v849
          %v940 = vadd.f32 %v920, %v852
          %v941 = vadd.f32 %v921, %v857
          %v942 = vadd.f32 %v922, %v860
          %v943 = vadd.f32 %v923, %v865
          %v944 = vadd.f32 %v924, %v868
          %v945 = vadd.f32 %v925, %v873
          %v946 = vadd.f32 %v926, %v876
          %947 = vst [vmem:[#allocation2] sm:$0xff] %v927
          %948 = vst [vmem:[#allocation2 + $0x8] sm:$0xff] %v928
          %949 = vst [vmem:[#allocation2 + $0x10] sm:$0xff] %v929
          %950 = vst [vmem:[#allocation2 + $0x18] sm:$0xff] %v930
          %951 = vst [vmem:[#allocation2 + $0x20] sm:$0xff] %v931
          %952 = vst [vmem:[#allocation2 + $0x28] sm:$0xff] %v932
          %953 = vst [vmem:[#allocation2 + $0x30] sm:$0xff] %v933
          %954 = vst [vmem:[#allocation2 + $0x38] sm:$0xff] %v934
          %955 = vst [vmem:[#allocation2 + $0x40] sm:$0xff] %v935
          %956 = vst [vmem:[#allocation2 + $0x48] sm:$0xff] %v936
          %957 = vst [vmem:[#allocation2 + $0x50] sm:$0xff] %v937
          %958 = vst [vmem:[#allocation2 + $0x58] sm:$0xff] %v938
          %959 = vst [vmem:[#allocation2 + $0x60] sm:$0xff] %v939
          %960 = vst [vmem:[#allocation2 + $0x68] sm:$0xff] %v940
          %961 = vst [vmem:[#allocation2 + $0x70] sm:$0xff] %v941
          %962 = vst [vmem:[#allocation2 + $0x78] sm:$0xff] %v942
          %963 = vst [vmem:[#allocation2 + $0x80] sm:$0xff] %v943
          %964 = vst [vmem:[#allocation2 + $0x88] sm:$0xff] %v944
          %965 = vst [vmem:[#allocation2 + $0x90] sm:$0xff] %v945
          %966 = vst [vmem:[#allocation2 + $0x98] sm:$0xff] %v946
        $region48: #{tpu_custom_call.1} parent=31 // pred_fallthru
          _
        // Predicated region
        $region49: #{tpu_custom_call.1} parent=31 // pred_check
          %p967 = pneg %p879
        $region50: #{tpu_custom_call.1} parent=31 // pred_check_branch
          %969 = sbr.rel (%p967) target = $region52
        $region51: #{tpu_custom_call.1} parent=31 // pred_region
          %v970 = vld [vmem:[#allocation2] sm:$0xff]
          %v971 = vld [vmem:[#allocation2 + $0x8] sm:$0xff]
          %v972 = vld [vmem:[#allocation2 + $0x10] sm:$0xff]
          %v973 = vld [vmem:[#allocation2 + $0x18] sm:$0xff]
          %v974 = vld [vmem:[#allocation2 + $0x20] sm:$0xff]
          %v975 = vld [vmem:[#allocation2 + $0x28] sm:$0xff]
          %v976 = vld [vmem:[#allocation2 + $0x30] sm:$0xff]
          %v977 = vld [vmem:[#allocation2 + $0x38] sm:$0xff]
          %v978 = vld [vmem:[#allocation2 + $0x40] sm:$0xff]
          %v979 = vld [vmem:[#allocation2 + $0x48] sm:$0xff]
          %v980 = vld [vmem:[#allocation2 + $0x50] sm:$0xff]
          %v981 = vld [vmem:[#allocation2 + $0x58] sm:$0xff]
          %v982 = vld [vmem:[#allocation2 + $0x60] sm:$0xff]
          %v983 = vld [vmem:[#allocation2 + $0x68] sm:$0xff]
          %v984 = vld [vmem:[#allocation2 + $0x70] sm:$0xff]
          %v985 = vld [vmem:[#allocation2 + $0x78] sm:$0xff]
          %v986 = vld [vmem:[#allocation2 + $0x80] sm:$0xff]
          %v987 = vld [vmem:[#allocation2 + $0x88] sm:$0xff]
          %v988 = vld [vmem:[#allocation2 + $0x90] sm:$0xff]
          %v989 = vld [vmem:[#allocation2 + $0x98] sm:$0xff]
          %v990 = vld [vmem:[%s258] sm:$0x1]
          %v992 = vlaneseq
          %v993 = vshrl.u32 %v992, 7
          %v994 = vsub.s32 0, %v993
          %v995 = vrot.slane %v990, %v994
          %v997 = vadd.f32 %v970, %v995
          %v998 = vadd.f32 %v971, %v995
          %v999 = vadd.f32 %v972, %v995
          %v1000 = vadd.f32 %v973, %v995
          %v1001 = vadd.f32 %v974, %v995
          %v1002 = vadd.f32 %v975, %v995
          %v1003 = vadd.f32 %v976, %v995
          %v1004 = vadd.f32 %v977, %v995
          %v1005 = vadd.f32 %v978, %v995
          %v1006 = vadd.f32 %v979, %v995
          %v1007 = vadd.f32 %v980, %v995
          %v1008 = vadd.f32 %v981, %v995
          %v1009 = vadd.f32 %v982, %v995
          %v1010 = vadd.f32 %v983, %v995
          %v1011 = vadd.f32 %v984, %v995
          %v1012 = vadd.f32 %v985, %v995
          %v1013 = vadd.f32 %v986, %v995
          %v1014 = vadd.f32 %v987, %v995
          %v1015 = vadd.f32 %v988, %v995
          %v1016 = vadd.f32 %v989, %v995
          %1017 = vst [vmem:[%s252] sm:$0xff] %v997
          %1018 = vst [vmem:[%s252 + $0x8] sm:$0xff] %v998
          %1019 = vst [vmem:[%s252 + $0x10] sm:$0xff] %v999
          %1020 = vst [vmem:[%s252 + $0x18] sm:$0xff] %v1000
          %1021 = vst [vmem:[%s252 + $0x20] sm:$0xff] %v1001
          %1022 = vst [vmem:[%s252 + $0x28] sm:$0xff] %v1002
          %1023 = vst [vmem:[%s252 + $0x30] sm:$0xff] %v1003
          %1024 = vst [vmem:[%s252 + $0x38] sm:$0xff] %v1004
          %1025 = vst [vmem:[%s252 + $0x40] sm:$0xff] %v1005
          %1026 = vst [vmem:[%s252 + $0x48] sm:$0xff] %v1006
          %1027 = vst [vmem:[%s252 + $0x50] sm:$0xff] %v1007
          %1028 = vst [vmem:[%s252 + $0x58] sm:$0xff] %v1008
          %1029 = vst [vmem:[%s252 + $0x60] sm:$0xff] %v1009
          %1030 = vst [vmem:[%s252 + $0x68] sm:$0xff] %v1010
          %1031 = vst [vmem:[%s252 + $0x70] sm:$0xff] %v1011
          %1032 = vst [vmem:[%s252 + $0x78] sm:$0xff] %v1012
          %1033 = vst [vmem:[%s252 + $0x80] sm:$0xff] %v1013
          %1034 = vst [vmem:[%s252 + $0x88] sm:$0xff] %v1014
          %1035 = vst [vmem:[%s252 + $0x90] sm:$0xff] %v1015
          %1036 = vst [vmem:[%s252 + $0x98] sm:$0xff] %v1016
        $region52: #{tpu_custom_call.1} parent=31 // pred_fallthru
          _
        %s1037 = sand.u32 %s132, 1
        %s1038 = scalar_lea.sflag [#allocation5], %s1037
        %s1039 = sand.u32 %s132, 1
        %s1040 = smul.addr %s1039, 160
        %s1041 = scalar_lea.vmem [#allocation8], %s1040
        // Predicated region
        $region53: #{tpu_custom_call.1} parent=31 // pred_check
          %p1042 = pneg %p142
        $region54: #{tpu_custom_call.1} parent=31 // pred_check_branch
          %1044 = sbr.rel (%p1042) target = $region56
        $region55: #{tpu_custom_call.1} parent=31 // pred_region
          %s1045 = smul.u32 20, %s26
          %s1047 = ssub.s32 2560, 2560
          %1048 = vsyncadd %s1038, %s1047
          %s1049 = smul.addr %s1045, 2
          %s1050 = sadd.s32 %s27, %s1049
          %s1051 = smul.addr %s1050, 128
          %s1052 = scalar_lea.hbm %s3, %s1051
          %s1053 = sshll.u32 %s1041, 4
          %s1054 = int_to_ptr.vmem [resolvable:$true] %s1053
          %1059 = dma.vmem_to_hbm [thread:$0]  %s1054, 2560, %s1052, %s1038, 128, 256, 8
        $region56: #{tpu_custom_call.1} parent=31 // pred_fallthru
          _
      $region32: #{tpu_custom_call.1} parent=5 // pred_fallthru
        _
      %p1060 = scmp.le.s32.totalorder 2, %s16
      // Predicated region
      $region57: #{tpu_custom_call.1} parent=5 // pred_check
        %p1061 = pneg %p1060
      $region58: #{tpu_custom_call.1} parent=5 // pred_check_branch
        %1063 = sbr.rel (%p1061) target = $region60
      $region59: #{tpu_custom_call.1} parent=5 // pred_region
        %s1064 = ssub.s32 %s16, 2
        // Predicated region
        $region61: #{tpu_custom_call.1} parent=59 // pred_check
          %p1065 = pneg %p148
        $region62: #{tpu_custom_call.1} parent=59 // pred_check_branch
          %1067 = sbr.rel (%p1065) target = $region64
        $region63: #{tpu_custom_call.1} parent=59 // pred_region
          %s1068 = sand.u32 %s133, 1
          %s1069 = scalar_lea.sflag [#allocation5], %s1068
          %s1070 = sand.u32 %s133, 1
          %s1071 = smul.addr %s1070, 160
          %s1072 = scalar_lea.vmem [#allocation8], %s1071
          %1073 = dma.done %s1069, 2560
        $region64: #{tpu_custom_call.1} parent=59 // pred_fallthru
          _
      $region60: #{tpu_custom_call.1} parent=5 // pred_fallthru
        _
    $region6: #{tpu_custom_call.1} parent=1 // loop_footer
      %s20 = sadd.s32 1, %s16
    $region7: #{tpu_custom_call.1} parent=1 // loop_footer_branch
      %15 = sbr.rel target = $region3
    $region8: #{tpu_custom_call.1} parent=1 // loop_exit
      _
    %1074 = vsyncpa [#allocation4], 1
    %s1075 = scalar_lea.sflag [#allocation4], 1
    %1076 = vsyncpa %s1075, 1
    %1077 = vsyncpa [#allocation7], 1
    %s1078 = scalar_lea.sflag [#allocation7], 1
    %1079 = vsyncpa %s1078, 1
    %1080 = vsyncpa [#allocation5], 1
    %s1081 = scalar_lea.sflag [#allocation5], 1
    %1082 = vsyncpa %s1081, 1

</llo_original>
